<compile_context>
chip_gen: v5e
topology: v5e:2x2
jax: 0.10.0
libtpu: 0.0.40
codegen_flags: <defaults>
</compile_context>

<pallas_src>
import jax
import jax.numpy as jnp
from jax.experimental import pallas as pl
from jax.experimental.pallas import tpu as pltpu


def _nonlin_reg_kernel(params_ref, x_ref, o_ref):
    """Elementwise hot path: (1 + b) - a*sqrt(x) - b*exp(c*x).

    params_ref: SMEM (4,) float32 -> [a, b, c, 1 + b]   (scalar prefetch)
    x_ref/o_ref: VMEM tiles of shape (TILE_R, LANES), float32
    """
    a = params_ref[0]
    b = params_ref[1]
    c = params_ref[2]
    one_plus_b = params_ref[3]
    x = x_ref[...]
    # sqrt / exp go to the EUP; mul/sub stay on the VPU; (1 + b) folded on host.
    o_ref[...] = one_plus_b - a * jnp.sqrt(x) - b * jnp.exp(c * x)


def _round_up(n, m):
    return ((n + m - 1) // m) * m


def nonlinear_regression(x, a=0.001, b=0.1, c=0.001, *, tile_rows=1024, lanes=1024):
    """Pallas wrapper. Accepts any shape; computes the elementwise forward pass."""
    orig_shape = x.shape
    orig_dtype = x.dtype

    xf = jnp.ravel(x).astype(jnp.float32)
    n = xf.shape[0]

    # Lane-dense layout: last dim a multiple of 128 (big for large inputs,
    # shrunk for tiny inputs so padding stays negligible).
    lanes = min(lanes, max(128, _round_up(n, 128)))
    lanes = _round_up(lanes, 128)

    rows = pl.cdiv(n, lanes)
    # Big blocks for large inputs; shrink (to a multiple of 8 sublanes) for
    # small inputs so we don't pad excessively.
    tile_r = min(tile_rows, _round_up(rows, 8))
    rows_padded = _round_up(rows, tile_r)
    total_padded = rows_padded * lanes

    if total_padded != n:
        xf = jnp.pad(xf, (0, total_padded - n))
    x2d = xf.reshape(rows_padded, lanes)

    # [a, b, c, 1 + b] -- folding the constant removes one VPU add per element.
    params = jnp.array([a, b, c, 1.0 + b], dtype=jnp.float32)

    grid = (rows_padded // tile_r,)

    # Advisory cost hint for the XLA scheduler around the custom call.
    cost = pl.CostEstimate(
        flops=4 * total_padded,              # 2 mul + 2 sub per element
        transcendentals=2 * total_padded,    # sqrt + exp per element
        bytes_accessed=8 * total_padded,     # f32 read + f32 write
    )

    out2d = pl.pallas_call(
        _nonlin_reg_kernel,
        out_shape=jax.ShapeDtypeStruct((rows_padded, lanes), jnp.float32),
        grid_spec=pltpu.PrefetchScalarGridSpec(
            num_scalar_prefetch=1,  # params -> SMEM before the grid runs
            grid=grid,
            in_specs=[
                pl.BlockSpec((tile_r, lanes), lambda i, params: (i, 0)),
            ],
            out_specs=pl.BlockSpec((tile_r, lanes), lambda i, params: (i, 0)),
        ),
        compiler_params=pltpu.CompilerParams(
            dimension_semantics=("parallel",),
            vmem_limit_bytes=32 * 1024 * 1024,  # safe on v5e/v6e/v7x
        ),
        cost_estimate=cost,
    )(params, x2d)

    out = out2d.reshape(-1)[:n].reshape(orig_shape)
    return out.astype(orig_dtype)


def _reference(x, a=0.001, b=0.1, c=0.001):
    xf = x.astype(jnp.float32)
    return (1.0 - a * jnp.sqrt(xf) - b * jnp.exp(c * xf) + b).astype(x.dtype)


if __name__ == "__main__":
    key = jax.random.PRNGKey(0)
    # Small positive inputs (sqrt requires x >= 0, matching typical usage).
    x = jax.random.uniform(
        key, (2, 4, 16, 16), dtype=jnp.float32, minval=0.0, maxval=10.0
    )

    y = nonlinear_regression(x)
    y = jax.block_until_ready(y)

    y_ref = _reference(x)
    assert y.shape == x.shape and y.dtype == x.dtype
    assert jnp.allclose(y, y_ref, atol=1e-5, rtol=1e-5), "mismatch vs reference"

    # Also exercise a non-multiple-of-block shape to check the padding path.
    x_ragged = jax.random.uniform(
        jax.random.PRNGKey(1), (3, 77, 130), dtype=jnp.float32, minval=0.0, maxval=5.0
    )
    y_ragged = jax.block_until_ready(nonlinear_regression(x_ragged))
    assert jnp.allclose(y_ragged, _reference(x_ragged), atol=1e-5, rtol=1e-5)

    print("KERNEL_OK")
</pallas_src>

<mosaic_0001>
module attributes {stable_mosaic.version = 11 : i64} {
  func.func @_nonlin_reg_kernel(%arg0: i32, %arg1: memref<4xf32, #tpu.memory_space<smem>>, %arg2: memref<8x1024xf32, #tpu.memory_space<vmem>>, %arg3: memref<8x1024xf32, #tpu.memory_space<vmem>>) attributes {dimension_semantics = [#tpu.dimension_semantics<parallel>], iteration_bounds = array<i64: 1>, scalar_prefetch = 1 : i64, scratch_operands = 0 : i64, tpu.core_type = #tpu.core_type<tc>, window_params = [{transform_indices = @transform_0, window_bounds = array<i64: 8, 1024>}, {transform_indices = @transform_1, window_bounds = array<i64: 8, 1024>}]} {
    %c0 = arith.constant 0 : index
    %0 = memref.load %arg1[%c0] : memref<4xf32, #tpu.memory_space<smem>>
    %c1 = arith.constant 1 : index
    %1 = memref.load %arg1[%c1] : memref<4xf32, #tpu.memory_space<smem>>
    %c2 = arith.constant 2 : index
    %2 = memref.load %arg1[%c2] : memref<4xf32, #tpu.memory_space<smem>>
    %c3 = arith.constant 3 : index
    %3 = memref.load %arg1[%c3] : memref<4xf32, #tpu.memory_space<smem>>
    %c0_0 = arith.constant 0 : index
    %c0_1 = arith.constant 0 : index
    %4 = vector.load %arg2[%c0_0, %c0_1] : memref<8x1024xf32, #tpu.memory_space<vmem>>, vector<8x1024xf32>
    %5 = math.sqrt %4 : vector<8x1024xf32>
    %6 = vector.broadcast %0 : f32 to vector<8x1024xf32>
    %7 = arith.mulf %6, %5 : vector<8x1024xf32>
    %8 = vector.broadcast %3 : f32 to vector<8x1024xf32>
    %9 = arith.subf %8, %7 : vector<8x1024xf32>
    %10 = vector.broadcast %2 : f32 to vector<8x1024xf32>
    %11 = arith.mulf %10, %4 : vector<8x1024xf32>
    %12 = math.exp %11 : vector<8x1024xf32>
    %13 = vector.broadcast %1 : f32 to vector<8x1024xf32>
    %14 = arith.mulf %13, %12 : vector<8x1024xf32>
    %15 = arith.subf %9, %14 : vector<8x1024xf32>
    %c0_2 = arith.constant 0 : index
    %c0_3 = arith.constant 0 : index
    %16 = vector.load %arg3[%c0_2, %c0_3] : memref<8x1024xf32, #tpu.memory_space<vmem>>, vector<8x1024xf32>
    tpu.vector_store %arg3[%c0_2, %c0_3], %15 {strides = array<i32>} : memref<8x1024xf32, #tpu.memory_space<vmem>>, vector<8x1024xf32>,
    return
  }
  func.func @transform_0(%arg0: i32, %arg1: memref<4xf32, #tpu.memory_space<smem>>) -> (i32, i32) {
    %c0_i32 = arith.constant 0 : i32
    %c0_i32_0 = arith.constant 0 : i32
    return %arg0, %c0_i32 : i32, i32
  }
  func.func @transform_1(%arg0: i32, %arg1: memref<4xf32, #tpu.memory_space<smem>>) -> (i32, i32) {
    %c0_i32 = arith.constant 0 : i32
    %c0_i32_0 = arith.constant 0 : i32
    return %arg0, %c0_i32 : i32, i32
  }
}

</mosaic_0001>

<llo_original>
// kernel: tpu_custom_call.1
$region0: #{tpu_custom_call.1}
  #allocation0 [shape = 'u32[]', space=smem, size = 0x4, offset = 0x4, fixed_abs, tag = 'smem constant byte address 0x4 - core index']
  #allocation1 [shape = 'u32[72,128]{1,0:T(1,128)}', space=vmem, size = 0x9000, scoped, tag = 'internal scratch']
  #allocation2 [shape = 's32[1]{0}', space=sflag, size = 0x4, scoped, tag = 'scoped memory for tpu_custom_call.1']
  #allocation3 [shape = 'u8[512]{0}', space=smem, size = 0x200, scoped, tag = 'prefetched SMEM operand 0']
  %s0 = inlined_call_operand.hbm [shape: f32[4], index: 0, kind: input, shape index: {}]
  %s1 = inlined_call_operand.hbm [shape: f32[8,1024], index: 1, kind: input, shape index: {}]
  %s2 = inlined_call_operand.hbm [shape: f32[8,1024], index: 2, kind: output, shape index: {}]
  %s3 = sld [smem:[#allocation0]]
  $region18: #{tpu_custom_call.1} parent=0
    _
  %s5 = ssub.s32 1, %s3
  %s6 = scalar_select 0, %s5, %s3
  %s8 = sshll.u32 %s0, 4
  %s9 = int_to_ptr.hbm [resolvable:$true] %s8
  %11 = dma.hbm_to_smem %s9, 16, [#allocation3], [#allocation2]
  %13 = dma.done [#allocation2], 16
  %14 = sfence
  $region1: #{tpu_custom_call.1} parent=0
    #allocation4 [shape = 'u8[32768]{0}', space=vmem, size = 0x8000, scoped, tag = 'input window, operand 1, single buffered']
    #allocation5 [shape = 's32[1]{0}', space=sflag, size = 0x4, scoped, tag = 'scoped memory for tpu_custom_call.1']
    #allocation6 [shape = 's32[1]{0}', space=sflag, size = 0x4, scoped, tag = 'scoped memory for tpu_custom_call.1']
    #allocation7 [shape = 'u8[32768]{0}', space=vmem, size = 0x8000, scoped, tag = 'output window, operand 0, single buffered']
    %15 = vsyncpa [#allocation5], 0
    %16 = vsyncpa [#allocation6], 0
    // Predicated region
    $region2: #{tpu_custom_call.1} parent=1 // pred_check
      _
    $region3: #{tpu_custom_call.1} parent=1 // pred_check_branch
      %18 = sbr.rel (0) target = $region5
    $region4: #{tpu_custom_call.1} parent=1 // pred_region
      %20 = vsyncadd [#allocation5], 0
      %s22 = sshll.u32 %s1, 4
      %s23 = int_to_ptr.hbm [resolvable:$true] %s22
      %s24 = sshll.u32 [#allocation4], 4
      %s25 = int_to_ptr.vmem [resolvable:$true] %s24
      %27 = dma.hbm_to_vmem [thread:$0]  %s23, 1024, %s25, [#allocation5]
    $region5: #{tpu_custom_call.1} parent=1 // pred_fallthru
      _
    // Predicated region
    $region6: #{tpu_custom_call.1} parent=1 // pred_check
      _
    $region7: #{tpu_custom_call.1} parent=1 // pred_check_branch
      %29 = sbr.rel (0) target = $region9
    $region8: #{tpu_custom_call.1} parent=1 // pred_region
      %31 = dma.done [#allocation5], 1024
    $region9: #{tpu_custom_call.1} parent=1 // pred_fallthru
      _
    %s32 = sld [smem:[#allocation3]]
    %s33 = sld [smem:[#allocation3 + $0x1]]
    %s34 = sld [smem:[#allocation3 + $0x2]]
    %s35 = sld [smem:[#allocation3 + $0x3]]
    %v36 = vld [vmem:[#allocation4] sm:$0xff]
    %v37 = vld [vmem:[#allocation4 + $0x8] sm:$0xff]
    %v38 = vld [vmem:[#allocation4 + $0x10] sm:$0xff]
    %v39 = vld [vmem:[#allocation4 + $0x18] sm:$0xff]
    %v40 = vld [vmem:[#allocation4 + $0x20] sm:$0xff]
    %v41 = vld [vmem:[#allocation4 + $0x28] sm:$0xff]
    %v42 = vld [vmem:[#allocation4 + $0x30] sm:$0xff]
    %v43 = vld [vmem:[#allocation4 + $0x38] sm:$0xff]
    %v44 = vrsqrt.pop %v36
    %v45 = vmul.f32 %v44, %v36
    %v46 = vmul.f32 %v45, %v44
    %v47 = vmul.f32 0.5, %v46
    %v48 = vsub.f32 1.5, %v47
    %v49 = vmul.f32 %v44, %v48
    %v50 = vmul.f32 %v36, %v49
    %vm51 = vcmp.eq.f32.partialorder %v36, inf
    %v52 = vsel %vm51, %v36, %v50
    %vm53 = vcmp.eq.f32.partialorder %v36, 0.0
    %v54 = vand.u32 %v36, 2147483648
    %v55 = vsel %vm53, %v54, %v52
    %v56 = vrsqrt.pop %v37
    %v57 = vmul.f32 %v56, %v37
    %v58 = vmul.f32 %v57, %v56
    %v59 = vmul.f32 0.5, %v58
    %v60 = vsub.f32 1.5, %v59
    %v61 = vmul.f32 %v56, %v60
    %v62 = vmul.f32 %v37, %v61
    %vm63 = vcmp.eq.f32.partialorder %v37, inf
    %v64 = vsel %vm63, %v37, %v62
    %vm65 = vcmp.eq.f32.partialorder %v37, 0.0
    %v66 = vand.u32 %v37, 2147483648
    %v67 = vsel %vm65, %v66, %v64
    %v68 = vrsqrt.pop %v38
    %v69 = vmul.f32 %v68, %v38
    %v70 = vmul.f32 %v69, %v68
    %v71 = vmul.f32 0.5, %v70
    %v72 = vsub.f32 1.5, %v71
    %v73 = vmul.f32 %v68, %v72
    %v74 = vmul.f32 %v38, %v73
    %vm75 = vcmp.eq.f32.partialorder %v38, inf
    %v76 = vsel %vm75, %v38, %v74
    %vm77 = vcmp.eq.f32.partialorder %v38, 0.0
    %v78 = vand.u32 %v38, 2147483648
    %v79 = vsel %vm77, %v78, %v76
    %v80 = vrsqrt.pop %v39
    %v81 = vmul.f32 %v80, %v39
    %v82 = vmul.f32 %v81, %v80
    %v83 = vmul.f32 0.5, %v82
    %v84 = vsub.f32 1.5, %v83
    %v85 = vmul.f32 %v80, %v84
    %v86 = vmul.f32 %v39, %v85
    %vm87 = vcmp.eq.f32.partialorder %v39, inf
    %v88 = vsel %vm87, %v39, %v86
    %vm89 = vcmp.eq.f32.partialorder %v39, 0.0
    %v90 = vand.u32 %v39, 2147483648
    %v91 = vsel %vm89, %v90, %v88
    %v92 = vrsqrt.pop %v40
    %v93 = vmul.f32 %v92, %v40
    %v94 = vmul.f32 %v93, %v92
    %v95 = vmul.f32 0.5, %v94
    %v96 = vsub.f32 1.5, %v95
    %v97 = vmul.f32 %v92, %v96
    %v98 = vmul.f32 %v40, %v97
    %vm99 = vcmp.eq.f32.partialorder %v40, inf
    %v100 = vsel %vm99, %v40, %v98
    %vm101 = vcmp.eq.f32.partialorder %v40, 0.0
    %v102 = vand.u32 %v40, 2147483648
    %v103 = vsel %vm101, %v102, %v100
    %v104 = vrsqrt.pop %v41
    %v105 = vmul.f32 %v104, %v41
    %v106 = vmul.f32 %v105, %v104
    %v107 = vmul.f32 0.5, %v106
    %v108 = vsub.f32 1.5, %v107
    %v109 = vmul.f32 %v104, %v108
    %v110 = vmul.f32 %v41, %v109
    %vm111 = vcmp.eq.f32.partialorder %v41, inf
    %v112 = vsel %vm111, %v41, %v110
    %vm113 = vcmp.eq.f32.partialorder %v41, 0.0
    %v114 = vand.u32 %v41, 2147483648
    %v115 = vsel %vm113, %v114, %v112
    %v116 = vrsqrt.pop %v42
    %v117 = vmul.f32 %v116, %v42
    %v118 = vmul.f32 %v117, %v116
    %v119 = vmul.f32 0.5, %v118
    %v120 = vsub.f32 1.5, %v119
    %v121 = vmul.f32 %v116, %v120
    %v122 = vmul.f32 %v42, %v121
    %vm123 = vcmp.eq.f32.partialorder %v42, inf
    %v124 = vsel %vm123, %v42, %v122
    %vm125 = vcmp.eq.f32.partialorder %v42, 0.0
    %v126 = vand.u32 %v42, 2147483648
    %v127 = vsel %vm125, %v126, %v124
    %v128 = vrsqrt.pop %v43
    %v129 = vmul.f32 %v128, %v43
    %v130 = vmul.f32 %v129, %v128
    %v131 = vmul.f32 0.5, %v130
    %v132 = vsub.f32 1.5, %v131
    %v133 = vmul.f32 %v128, %v132
    %v134 = vmul.f32 %v43, %v133
    %vm135 = vcmp.eq.f32.partialorder %v43, inf
    %v136 = vsel %vm135, %v43, %v134
    %vm137 = vcmp.eq.f32.partialorder %v43, 0.0
    %v138 = vand.u32 %v43, 2147483648
    %v139 = vsel %vm137, %v138, %v136
    %v140 = vstv %s32
    %v141 = vmul.f32 %v140, %v55
    %v142 = vmul.f32 %v140, %v67
    %v143 = vmul.f32 %v140, %v79
    %v144 = vmul.f32 %v140, %v91
    %v145 = vmul.f32 %v140, %v103
    %v146 = vmul.f32 %v140, %v115
    %v147 = vmul.f32 %v140, %v127
    %v148 = vmul.f32 %v140, %v139
    %v149 = vstv %s35
    %v150 = vsub.f32 %v149, %v141
    %v151 = vsub.f32 %v149, %v142
    %v152 = vsub.f32 %v149, %v143
    %v153 = vsub.f32 %v149, %v144
    %v154 = vsub.f32 %v149, %v145
    %v155 = vsub.f32 %v149, %v146
    %v156 = vsub.f32 %v149, %v147
    %v157 = vsub.f32 %v149, %v148
    %v158 = vstv %s34
    %v159 = vmul.f32 %v158, %v36
    %v160 = vmul.f32 %v158, %v37
    %v161 = vmul.f32 %v158, %v38
    %v162 = vmul.f32 %v158, %v39
    %v163 = vmul.f32 %v158, %v40
    %v164 = vmul.f32 %v158, %v41
    %v165 = vmul.f32 %v158, %v42
    %v166 = vmul.f32 %v158, %v43
    %v167 = vmul.f32 %v159, 1.442695
    %v168 = vpow.pop %v167
    %v169 = vmul.f32 %v160, 1.442695
    %v170 = vpow.pop %v169
    %v171 = vmul.f32 %v161, 1.442695
    %v172 = vpow.pop %v171
    %v173 = vmul.f32 %v162, 1.442695
    %v174 = vpow.pop %v173
    %v175 = vmul.f32 %v163, 1.442695
    %v176 = vpow.pop %v175
    %v177 = vmul.f32 %v164, 1.442695
    %v178 = vpow.pop %v177
    %v179 = vmul.f32 %v165, 1.442695
    %v180 = vpow.pop %v179
    %v181 = vmul.f32 %v166, 1.442695
    %v182 = vpow.pop %v181
    %v183 = vstv %s33
    %v184 = vmul.f32 %v183, %v168
    %v185 = vmul.f32 %v183, %v170
    %v186 = vmul.f32 %v183, %v172
    %v187 = vmul.f32 %v183, %v174
    %v188 = vmul.f32 %v183, %v176
    %v189 = vmul.f32 %v183, %v178
    %v190 = vmul.f32 %v183, %v180
    %v191 = vmul.f32 %v183, %v182
    %v192 = vsub.f32 %v150, %v184
    %v193 = vsub.f32 %v151, %v185
    %v194 = vsub.f32 %v152, %v186
    %v195 = vsub.f32 %v153, %v187
    %v196 = vsub.f32 %v154, %v188
    %v197 = vsub.f32 %v155, %v189
    %v198 = vsub.f32 %v156, %v190
    %v199 = vsub.f32 %v157, %v191
    %200 = vst [vmem:[#allocation7] sm:$0xff] %v192
    %201 = vst [vmem:[#allocation7 + $0x8] sm:$0xff] %v193
    %202 = vst [vmem:[#allocation7 + $0x10] sm:$0xff] %v194
    %203 = vst [vmem:[#allocation7 + $0x18] sm:$0xff] %v195
    %204 = vst [vmem:[#allocation7 + $0x20] sm:$0xff] %v196
    %205 = vst [vmem:[#allocation7 + $0x28] sm:$0xff] %v197
    %206 = vst [vmem:[#allocation7 + $0x30] sm:$0xff] %v198
    %207 = vst [vmem:[#allocation7 + $0x38] sm:$0xff] %v199
    // Predicated region
    $region10: #{tpu_custom_call.1} parent=1 // pred_check
      _
    $region11: #{tpu_custom_call.1} parent=1 // pred_check_branch
      %209 = sbr.rel (0) target = $region13
    $region12: #{tpu_custom_call.1} parent=1 // pred_region
      %211 = vsyncadd [#allocation6], 0
      %s213 = sshll.u32 [#allocation7], 4
      %s214 = int_to_ptr.vmem [resolvable:$true] %s213
      %s215 = sshll.u32 %s2, 4
      %s216 = int_to_ptr.hbm [resolvable:$true] %s215
      %218 = dma.vmem_to_hbm [thread:$0]  %s214, 1024, %s216, [#allocation6]
    $region13: #{tpu_custom_call.1} parent=1 // pred_fallthru
      _
    // Predicated region
    $region14: #{tpu_custom_call.1} parent=1 // pred_check
      _
    $region15: #{tpu_custom_call.1} parent=1 // pred_check_branch
      %220 = sbr.rel (0) target = $region17
    $region16: #{tpu_custom_call.1} parent=1 // pred_region
      %222 = dma.done [#allocation6], 1024
    $region17: #{tpu_custom_call.1} parent=1 // pred_fallthru
      _
    %223 = vsyncpa [#allocation5], 1
    %224 = vsyncpa [#allocation6], 1

</llo_original>
